<compile_context>
chip_gen: v7x
topology: tpu7x:2x2x1
jax: 0.10.0
libtpu: 0.0.40
codegen_flags: <defaults>
</compile_context>

<pallas_src>
import functools

import jax
import jax.numpy as jnp
from jax import lax
from jax.experimental import pallas as pl
from jax.experimental.pallas import tpu as pltpu

EPS = 1e-5          # nn.InstanceNorm2d default eps
NEG_SLOPE = 0.01    # nn.LeakyReLU default negative_slope


def _round_up(x, m):
    return ((x + m - 1) // m) * m


def _make_tap_masks(H, W):
    """(9, H*W) f32 boundary masks, tap order kh-major then kw."""
    HW = H * W
    r = jnp.arange(HW, dtype=jnp.int32) // W
    c = jnp.arange(HW, dtype=jnp.int32) % W
    rows = []
    for dh in (-1, 0, 1):
        for dw in (-1, 0, 1):
            ok = ((r + dh >= 0) & (r + dh <= H - 1) &
                  (c + dw >= 0) & (c + dw <= W - 1))
            rows.append(ok.astype(jnp.float32))
    return jnp.stack(rows, axis=0)


def double_conv_kernel(x_ref, w1_ref, w2_ref, mask_ref, o_ref, *, H, W, mxu_dtype):
    # x_ref   : (B_blk, C_in_pad, HW)   lane-dense flattened input block
    # w1_ref  : (C_mid_pad, 9*C_in_pad) repacked conv1 weights (tap-major, ci)
    # w2_ref  : (C_out, 9*C_mid_pad)    repacked conv2 weights
    # mask_ref: (9, HW)                 precomputed boundary masks (resident)
    # o_ref   : (B_blk, C_out, HW)      lane-dense flattened output block
    HW = H * W
    inv_hw = 1.0 / HW

    # Hoisted: weights + masks loaded once, shared by every image in the block.
    w1 = w1_ref[...].astype(jnp.float32)
    w2 = w2_ref[...].astype(jnp.float32)
    masks = mask_ref[...]                                   # (9, HW) f32
    if mxu_dtype is not None:                               # bf16 MXU on v6e/v7x
        w1_mx, w2_mx = w1.astype(mxu_dtype), w2.astype(mxu_dtype)
    else:
        w1_mx, w2_mx = w1, w2

    taps = [(dh, dw) for dh in (-1, 0, 1) for dw in (-1, 0, 1)]

    def conv3x3(a, w_mx):
        # a: (C_pad, HW) f32.  Build the (9*C_pad, HW) im2col patch matrix with
        # lane rolls + resident masks, then one MXU matmul (f32 accumulation).
        cols = []
        for t, (dh, dw) in enumerate(taps):
            d = dh * W + dw
            s = a if d == 0 else pltpu.roll(a, (-d) % HW, axis=1)
            if not (dh == 0 and dw == 0):
                s = s * masks[t:t + 1, :]       # zero wrapped / padded lanes
            cols.append(s)
        patches = jnp.concatenate(cols, axis=0)             # sublane-aligned
        if mxu_dtype is not None:
            patches = patches.astype(mxu_dtype)
        return jnp.dot(w_mx, patches, preferred_element_type=jnp.float32)

    def inorm_lrelu(acc):
        # Per-(instance, channel) InstanceNorm (no affine) + LeakyReLU, f32.
        mean = jnp.sum(acc, axis=1, keepdims=True) * inv_hw
        cen = acc - mean
        var = jnp.sum(cen * cen, axis=1, keepdims=True) * inv_hw
        y = cen * lax.rsqrt(var + EPS)
        return jnp.where(y >= 0, y, NEG_SLOPE * y)

    b_blk = x_ref.shape[0]
    for b in range(b_blk):                       # static unrolled batch loop
        x = x_ref[b].astype(jnp.float32)         # (C_in_pad, HW)
        y1 = inorm_lrelu(conv3x3(x, w1_mx))      # (C_mid_pad, HW)
        y2 = inorm_lrelu(conv3x3(y1, w2_mx))     # (C_out, HW)
        o_ref[b] = y2.astype(o_ref.dtype)


def double_conv(x, w1, w2, *, mxu_dtype=None):
    """x: (N, C_in, H, W); w1: (C_mid, C_in, 3, 3); w2: (C_out, C_mid, 3, 3).

    mxu_dtype: optional dtype (e.g. jnp.bfloat16) for the MXU inputs on
    v6e/v7x; accumulation stays f32.  Default None keeps f32 end to end.
    """
    N, C_in, H, W = x.shape
    C_mid = w1.shape[0]
    C_out = w2.shape[0]
    HW = H * W

    # Batch blocking: keep >= 2 parallel grid steps when N >= 2 (feeds both
    # v7x TensorCores) while amortizing per-step overhead over B_blk images.
    num_blocks = min(N, 2)
    B_blk = pl.cdiv(N, num_blocks)
    N_pad = num_blocks * B_blk

    # Sublane-align the 9-tap concat: pad C_in / C_mid up to multiples of 8.
    C_in_p = _round_up(C_in, 8)
    C_mid_p = _round_up(C_mid, 8)

    # Lane-dense input (no spatial padding copy); zero-pad batch / channels.
    x_flat = x.reshape(N, C_in, HW)
    if N_pad != N or C_in_p != C_in:
        x_flat = jnp.pad(x_flat, ((0, N_pad - N), (0, C_in_p - C_in), (0, 0)))

    # Repack weights OIHW -> (O_pad, kh, kw, ci_pad) -> (O_pad, 9*ci_pad),
    # matching the kernel's tap order (kh-major, then kw, then ci).
    w1_p = jnp.pad(w1, ((0, C_mid_p - C_mid), (0, C_in_p - C_in), (0, 0), (0, 0)))
    w2_p = jnp.pad(w2, ((0, 0), (0, C_mid_p - C_mid), (0, 0), (0, 0)))
    w1_flat = jnp.transpose(w1_p, (0, 2, 3, 1)).reshape(C_mid_p, 9 * C_in_p)
    w2_flat = jnp.transpose(w2_p, (0, 2, 3, 1)).reshape(C_out, 9 * C_mid_p)

    masks = _make_tap_masks(H, W)                            # (9, HW) f32

    out_flat = pl.pallas_call(
        functools.partial(double_conv_kernel, H=H, W=W, mxu_dtype=mxu_dtype),
        out_shape=jax.ShapeDtypeStruct((N_pad, C_out, HW), x.dtype),
        grid_spec=pltpu.PrefetchScalarGridSpec(
            num_scalar_prefetch=0,
            grid=(num_blocks,),
            in_specs=[
                pl.BlockSpec((B_blk, C_in_p, HW), lambda n: (n, 0, 0)),
                pl.BlockSpec((C_mid_p, 9 * C_in_p), lambda n: (0, 0)),
                pl.BlockSpec((C_out, 9 * C_mid_p), lambda n: (0, 0)),
                pl.BlockSpec((9, HW), lambda n: (0, 0)),
            ],
            out_specs=pl.BlockSpec((B_blk, C_out, HW), lambda n: (n, 0, 0)),
        ),
        compiler_params=pltpu.CompilerParams(
            dimension_semantics=("parallel",),
        ),
    )(x_flat, w1_flat, w2_flat, masks)

    return out_flat[:N].reshape(N, C_out, H, W)


def _reference(x, w1, w2):
    # Pure-JAX reference for verification.
    def conv(a, w):
        return lax.conv_general_dilated(
            a, w, window_strides=(1, 1), padding=[(1, 1), (1, 1)],
            dimension_numbers=("NCHW", "OIHW", "NCHW"))

    def inorm_lrelu(y):
        mean = y.mean(axis=(2, 3), keepdims=True)
        var = ((y - mean) ** 2).mean(axis=(2, 3), keepdims=True)
        y = (y - mean) / jnp.sqrt(var + EPS)
        return jnp.where(y >= 0, y, NEG_SLOPE * y)

    return inorm_lrelu(conv(inorm_lrelu(conv(x, w1)), w2))


if __name__ == "__main__":
    # Small shapes consistent with the module: N=2, C_in=4, C_mid=C_out=8, 16x16.
    N, C_in, C_mid, C_out, H, W = 2, 4, 8, 8, 16, 16

    key = jax.random.PRNGKey(0)
    kx, k1, k2 = jax.random.split(key, 3)
    x = jax.random.normal(kx, (N, C_in, H, W), dtype=jnp.float32)
    # Deterministic synthetic Conv2d weights (bias=False), OIHW layout like PyTorch.
    w1 = 0.1 * jax.random.normal(k1, (C_mid, C_in, 3, 3), dtype=jnp.float32)
    w2 = 0.1 * jax.random.normal(k2, (C_out, C_mid, 3, 3), dtype=jnp.float32)

    out = jax.block_until_ready(double_conv(x, w1, w2))
    ref = jax.block_until_ready(_reference(x, w1, w2))

    assert out.shape == (N, C_out, H, W)
    assert jnp.allclose(out, ref, atol=5e-3, rtol=5e-3), float(jnp.max(jnp.abs(out - ref)))
    print("KERNEL_OK")
</pallas_src>

<mosaic_0001>
module attributes {stable_mosaic.version = 11 : i64} {
  func.func @double_conv_kernel(%arg0: i32, %arg1: memref<1x8x256xf32, #tpu.memory_space<vmem>>, %arg2: memref<8x72xf32, #tpu.memory_space<vmem>>, %arg3: memref<8x72xf32, #tpu.memory_space<vmem>>, %arg4: memref<9x256xf32, #tpu.memory_space<vmem>>, %arg5: memref<1x8x256xf32, #tpu.memory_space<vmem>>) attributes {dimension_semantics = [#tpu.dimension_semantics<parallel>], iteration_bounds = array<i64: 2>, scalar_prefetch = 0 : i64, scratch_operands = 0 : i64, tpu.core_type = #tpu.core_type<tc>, window_params = [{transform_indices = @transform_0, window_bounds = array<i64: 1, 8, 256>}, {pipeline_mode = #tpu.pipeline_mode<synchronous>, transform_indices = @transform_1, window_bounds = array<i64: 8, 72>}, {pipeline_mode = #tpu.pipeline_mode<synchronous>, transform_indices = @transform_2, window_bounds = array<i64: 8, 72>}, {pipeline_mode = #tpu.pipeline_mode<synchronous>, transform_indices = @transform_3, window_bounds = array<i64: 9, 256>}, {transform_indices = @transform_4, window_bounds = array<i64: 1, 8, 256>}]} {
    %c0 = arith.constant 0 : index
    %c0_0 = arith.constant 0 : index
    %0 = vector.load %arg2[%c0, %c0_0] : memref<8x72xf32, #tpu.memory_space<vmem>>, vector<8x72xf32>
    %c0_1 = arith.constant 0 : index
    %c0_2 = arith.constant 0 : index
    %1 = vector.load %arg3[%c0_1, %c0_2] : memref<8x72xf32, #tpu.memory_space<vmem>>, vector<8x72xf32>
    %c0_3 = arith.constant 0 : index
    %c0_4 = arith.constant 0 : index
    %2 = vector.load %arg4[%c0_3, %c0_4] : memref<9x256xf32, #tpu.memory_space<vmem>>, vector<9x256xf32>
    %c0_5 = arith.constant 0 : index
    %c0_6 = arith.constant 0 : index
    %c0_7 = arith.constant 0 : index
    %3 = vector.load %arg1[%c0_5, %c0_6, %c0_7] : memref<1x8x256xf32, #tpu.memory_space<vmem>>, vector<1x8x256xf32>
    %4 = vector.shape_cast %3 : vector<1x8x256xf32> to vector<8x256xf32>
    %c17_i32 = arith.constant 17 : i32
    %5 = tpu.dynamic_rotate %4 by %c17_i32 dim 1 : vector<8x256xf32>, i32 -> vector<8x256xf32>
    %6 = vector.extract_strided_slice %2 {offsets = [0, 0], sizes = [1, 256], strides = [1, 1]} : vector<9x256xf32> to vector<1x256xf32>
    %7 = vector.broadcast %6 : vector<1x256xf32> to vector<8x256xf32>
    %8 = arith.mulf %5, %7 : vector<8x256xf32>
    %c16_i32 = arith.constant 16 : i32
    %9 = tpu.dynamic_rotate %4 by %c16_i32 dim 1 : vector<8x256xf32>, i32 -> vector<8x256xf32>
    %10 = vector.extract_strided_slice %2 {offsets = [1, 0], sizes = [1, 256], strides = [1, 1]} : vector<9x256xf32> to vector<1x256xf32>
    %11 = vector.broadcast %10 : vector<1x256xf32> to vector<8x256xf32>
    %12 = arith.mulf %9, %11 : vector<8x256xf32>
    %c15_i32 = arith.constant 15 : i32
    %13 = tpu.dynamic_rotate %4 by %c15_i32 dim 1 : vector<8x256xf32>, i32 -> vector<8x256xf32>
    %14 = vector.extract_strided_slice %2 {offsets = [2, 0], sizes = [1, 256], strides = [1, 1]} : vector<9x256xf32> to vector<1x256xf32>
    %15 = vector.broadcast %14 : vector<1x256xf32> to vector<8x256xf32>
    %16 = arith.mulf %13, %15 : vector<8x256xf32>
    %c1_i32 = arith.constant 1 : i32
    %17 = tpu.dynamic_rotate %4 by %c1_i32 dim 1 : vector<8x256xf32>, i32 -> vector<8x256xf32>
    %18 = vector.extract_strided_slice %2 {offsets = [3, 0], sizes = [1, 256], strides = [1, 1]} : vector<9x256xf32> to vector<1x256xf32>
    %19 = vector.broadcast %18 : vector<1x256xf32> to vector<8x256xf32>
    %20 = arith.mulf %17, %19 : vector<8x256xf32>
    %c255_i32 = arith.constant 255 : i32
    %21 = tpu.dynamic_rotate %4 by %c255_i32 dim 1 : vector<8x256xf32>, i32 -> vector<8x256xf32>
    %22 = vector.extract_strided_slice %2 {offsets = [5, 0], sizes = [1, 256], strides = [1, 1]} : vector<9x256xf32> to vector<1x256xf32>
    %23 = vector.broadcast %22 : vector<1x256xf32> to vector<8x256xf32>
    %24 = arith.mulf %21, %23 : vector<8x256xf32>
    %c241_i32 = arith.constant 241 : i32
    %25 = tpu.dynamic_rotate %4 by %c241_i32 dim 1 : vector<8x256xf32>, i32 -> vector<8x256xf32>
    %26 = vector.extract_strided_slice %2 {offsets = [6, 0], sizes = [1, 256], strides = [1, 1]} : vector<9x256xf32> to vector<1x256xf32>
    %27 = vector.broadcast %26 : vector<1x256xf32> to vector<8x256xf32>
    %28 = arith.mulf %25, %27 : vector<8x256xf32>
    %c240_i32 = arith.constant 240 : i32
    %29 = tpu.dynamic_rotate %4 by %c240_i32 dim 1 : vector<8x256xf32>, i32 -> vector<8x256xf32>
    %30 = vector.extract_strided_slice %2 {offsets = [7, 0], sizes = [1, 256], strides = [1, 1]} : vector<9x256xf32> to vector<1x256xf32>
    %31 = vector.broadcast %30 : vector<1x256xf32> to vector<8x256xf32>
    %32 = arith.mulf %29, %31 : vector<8x256xf32>
    %c239_i32 = arith.constant 239 : i32
    %33 = tpu.dynamic_rotate %4 by %c239_i32 dim 1 : vector<8x256xf32>, i32 -> vector<8x256xf32>
    %34 = vector.extract_strided_slice %2 {offsets = [8, 0], sizes = [1, 256], strides = [1, 1]} : vector<9x256xf32> to vector<1x256xf32>
    %35 = vector.broadcast %34 : vector<1x256xf32> to vector<8x256xf32>
    %36 = arith.mulf %33, %35 : vector<8x256xf32>
    %37 = tpu.concatenate %8, %12, %16, %20, %4, %24, %28, %32, %36 in 0 : vector<8x256xf32>, vector<8x256xf32>, vector<8x256xf32>, vector<8x256xf32>, vector<8x256xf32>, vector<8x256xf32>, vector<8x256xf32>, vector<8x256xf32>, vector<8x256xf32> -> vector<72x256xf32>
    %cst = arith.constant dense<0.000000e+00> : vector<8x256xf32>
    %38 = tpu.matmul %0, %37, %cst {dimension_numbers = #tpu.dot_dimension_numbers<[1], [0], [0], [1], [0, 0, 1, 1], [], []>} : vector<8x72xf32>, vector<72x256xf32>, vector<8x256xf32> -> vector<8x256xf32>
    %cst_8 = arith.constant dense<0.000000e+00> : vector<8xf32>
    %39 = vector.multi_reduction <add>, %38, %cst_8 [1] : vector<8x256xf32> to vector<8xf32>
    %40 = vector.shape_cast %39 : vector<8xf32> to vector<8x1xf32>
    %cst_9 = arith.constant 3.906250e-03 : f32
    %41 = vector.broadcast %cst_9 : f32 to vector<8x1xf32>
    %42 = arith.mulf %40, %41 : vector<8x1xf32>
    %43 = vector.broadcast %42 : vector<8x1xf32> to vector<8x256xf32>
    %44 = arith.subf %38, %43 : vector<8x256xf32>
    %45 = arith.mulf %44, %44 : vector<8x256xf32>
    %cst_10 = arith.constant dense<0.000000e+00> : vector<8xf32>
    %46 = vector.multi_reduction <add>, %45, %cst_10 [1] : vector<8x256xf32> to vector<8xf32>
    %47 = vector.shape_cast %46 : vector<8xf32> to vector<8x1xf32>
    %cst_11 = arith.constant 3.906250e-03 : f32
    %48 = vector.broadcast %cst_11 : f32 to vector<8x1xf32>
    %49 = arith.mulf %47, %48 : vector<8x1xf32>
    %cst_12 = arith.constant 9.99999974E-6 : f32
    %50 = vector.broadcast %cst_12 : f32 to vector<8x1xf32>
    %51 = arith.addf %49, %50 : vector<8x1xf32>
    %52 = math.rsqrt %51 : vector<8x1xf32>
    %53 = vector.broadcast %52 : vector<8x1xf32> to vector<8x256xf32>
    %54 = arith.mulf %44, %53 : vector<8x256xf32>
    %cst_13 = arith.constant 0.000000e+00 : f32
    %55 = vector.broadcast %cst_13 : f32 to vector<8x256xf32>
    %56 = arith.cmpf oge, %54, %55 : vector<8x256xf32>
    %cst_14 = arith.constant 0.00999999977 : f32
    %57 = vector.broadcast %cst_14 : f32 to vector<8x256xf32>
    %58 = arith.mulf %57, %54 : vector<8x256xf32>
    %59 = arith.select %56, %54, %58 : vector<8x256xi1>, vector<8x256xf32>
    %c17_i32_15 = arith.constant 17 : i32
    %60 = tpu.dynamic_rotate %59 by %c17_i32_15 dim 1 : vector<8x256xf32>, i32 -> vector<8x256xf32>
    %61 = vector.extract_strided_slice %2 {offsets = [0, 0], sizes = [1, 256], strides = [1, 1]} : vector<9x256xf32> to vector<1x256xf32>
    %62 = vector.broadcast %61 : vector<1x256xf32> to vector<8x256xf32>
    %63 = arith.mulf %60, %62 : vector<8x256xf32>
    %c16_i32_16 = arith.constant 16 : i32
    %64 = tpu.dynamic_rotate %59 by %c16_i32_16 dim 1 : vector<8x256xf32>, i32 -> vector<8x256xf32>
    %65 = vector.extract_strided_slice %2 {offsets = [1, 0], sizes = [1, 256], strides = [1, 1]} : vector<9x256xf32> to vector<1x256xf32>
    %66 = vector.broadcast %65 : vector<1x256xf32> to vector<8x256xf32>
    %67 = arith.mulf %64, %66 : vector<8x256xf32>
    %c15_i32_17 = arith.constant 15 : i32
    %68 = tpu.dynamic_rotate %59 by %c15_i32_17 dim 1 : vector<8x256xf32>, i32 -> vector<8x256xf32>
    %69 = vector.extract_strided_slice %2 {offsets = [2, 0], sizes = [1, 256], strides = [1, 1]} : vector<9x256xf32> to vector<1x256xf32>
    %70 = vector.broadcast %69 : vector<1x256xf32> to vector<8x256xf32>
    %71 = arith.mulf %68, %70 : vector<8x256xf32>
    %c1_i32_18 = arith.constant 1 : i32
    %72 = tpu.dynamic_rotate %59 by %c1_i32_18 dim 1 : vector<8x256xf32>, i32 -> vector<8x256xf32>
    %73 = vector.extract_strided_slice %2 {offsets = [3, 0], sizes = [1, 256], strides = [1, 1]} : vector<9x256xf32> to vector<1x256xf32>
    %74 = vector.broadcast %73 : vector<1x256xf32> to vector<8x256xf32>
    %75 = arith.mulf %72, %74 : vector<8x256xf32>
    %c255_i32_19 = arith.constant 255 : i32
    %76 = tpu.dynamic_rotate %59 by %c255_i32_19 dim 1 : vector<8x256xf32>, i32 -> vector<8x256xf32>
    %77 = vector.extract_strided_slice %2 {offsets = [5, 0], sizes = [1, 256], strides = [1, 1]} : vector<9x256xf32> to vector<1x256xf32>
    %78 = vector.broadcast %77 : vector<1x256xf32> to vector<8x256xf32>
    %79 = arith.mulf %76, %78 : vector<8x256xf32>
    %c241_i32_20 = arith.constant 241 : i32
    %80 = tpu.dynamic_rotate %59 by %c241_i32_20 dim 1 : vector<8x256xf32>, i32 -> vector<8x256xf32>
    %81 = vector.extract_strided_slice %2 {offsets = [6, 0], sizes = [1, 256], strides = [1, 1]} : vector<9x256xf32> to vector<1x256xf32>
    %82 = vector.broadcast %81 : vector<1x256xf32> to vector<8x256xf32>
    %83 = arith.mulf %80, %82 : vector<8x256xf32>
    %c240_i32_21 = arith.constant 240 : i32
    %84 = tpu.dynamic_rotate %59 by %c240_i32_21 dim 1 : vector<8x256xf32>, i32 -> vector<8x256xf32>
    %85 = vector.extract_strided_slice %2 {offsets = [7, 0], sizes = [1, 256], strides = [1, 1]} : vector<9x256xf32> to vector<1x256xf32>
    %86 = vector.broadcast %85 : vector<1x256xf32> to vector<8x256xf32>
    %87 = arith.mulf %84, %86 : vector<8x256xf32>
    %c239_i32_22 = arith.constant 239 : i32
    %88 = tpu.dynamic_rotate %59 by %c239_i32_22 dim 1 : vector<8x256xf32>, i32 -> vector<8x256xf32>
    %89 = vector.extract_strided_slice %2 {offsets = [8, 0], sizes = [1, 256], strides = [1, 1]} : vector<9x256xf32> to vector<1x256xf32>
    %90 = vector.broadcast %89 : vector<1x256xf32> to vector<8x256xf32>
    %91 = arith.mulf %88, %90 : vector<8x256xf32>
    %92 = tpu.concatenate %63, %67, %71, %75, %59, %79, %83, %87, %91 in 0 : vector<8x256xf32>, vector<8x256xf32>, vector<8x256xf32>, vector<8x256xf32>, vector<8x256xf32>, vector<8x256xf32>, vector<8x256xf32>, vector<8x256xf32>, vector<8x256xf32> -> vector<72x256xf32>
    %cst_23 = arith.constant dense<0.000000e+00> : vector<8x256xf32>
    %93 = tpu.matmul %1, %92, %cst_23 {dimension_numbers = #tpu.dot_dimension_numbers<[1], [0], [0], [1], [0, 0, 1, 1], [], []>} : vector<8x72xf32>, vector<72x256xf32>, vector<8x256xf32> -> vector<8x256xf32>
    %cst_24 = arith.constant dense<0.000000e+00> : vector<8xf32>
    %94 = vector.multi_reduction <add>, %93, %cst_24 [1] : vector<8x256xf32> to vector<8xf32>
    %95 = vector.shape_cast %94 : vector<8xf32> to vector<8x1xf32>
    %cst_25 = arith.constant 3.906250e-03 : f32
    %96 = vector.broadcast %cst_25 : f32 to vector<8x1xf32>
    %97 = arith.mulf %95, %96 : vector<8x1xf32>
    %98 = vector.broadcast %97 : vector<8x1xf32> to vector<8x256xf32>
    %99 = arith.subf %93, %98 : vector<8x256xf32>
    %100 = arith.mulf %99, %99 : vector<8x256xf32>
    %cst_26 = arith.constant dense<0.000000e+00> : vector<8xf32>
    %101 = vector.multi_reduction <add>, %100, %cst_26 [1] : vector<8x256xf32> to vector<8xf32>
    %102 = vector.shape_cast %101 : vector<8xf32> to vector<8x1xf32>
    %cst_27 = arith.constant 3.906250e-03 : f32
    %103 = vector.broadcast %cst_27 : f32 to vector<8x1xf32>
    %104 = arith.mulf %102, %103 : vector<8x1xf32>
    %cst_28 = arith.constant 9.99999974E-6 : f32
    %105 = vector.broadcast %cst_28 : f32 to vector<8x1xf32>
    %106 = arith.addf %104, %105 : vector<8x1xf32>
    %107 = math.rsqrt %106 : vector<8x1xf32>
    %108 = vector.broadcast %107 : vector<8x1xf32> to vector<8x256xf32>
    %109 = arith.mulf %99, %108 : vector<8x256xf32>
    %cst_29 = arith.constant 0.000000e+00 : f32
    %110 = vector.broadcast %cst_29 : f32 to vector<8x256xf32>
    %111 = arith.cmpf oge, %109, %110 : vector<8x256xf32>
    %cst_30 = arith.constant 0.00999999977 : f32
    %112 = vector.broadcast %cst_30 : f32 to vector<8x256xf32>
    %113 = arith.mulf %112, %109 : vector<8x256xf32>
    %114 = arith.select %111, %109, %113 : vector<8x256xi1>, vector<8x256xf32>
    %c0_31 = arith.constant 0 : index
    %c0_32 = arith.constant 0 : index
    %c0_33 = arith.constant 0 : index
    %115 = vector.load %arg5[%c0_31, %c0_32, %c0_33] : memref<1x8x256xf32, #tpu.memory_space<vmem>>, vector<1x8x256xf32>
    %116 = vector.shape_cast %115 : vector<1x8x256xf32> to vector<8x256xf32>
    %117 = vector.shape_cast %114 : vector<8x256xf32> to vector<1x8x256xf32>
    tpu.vector_store %arg5[%c0_31, %c0_32, %c0_33], %117 {strides = array<i32>} : memref<1x8x256xf32, #tpu.memory_space<vmem>>, vector<1x8x256xf32>,
    return
  }
  func.func @transform_0(%arg0: i32) -> (i32, i32, i32) {
    %c0_i32 = arith.constant 0 : i32
    %c0_i32_0 = arith.constant 0 : i32
    %c0_i32_1 = arith.constant 0 : i32
    return %arg0, %c0_i32, %c0_i32_0 : i32, i32, i32
  }
  func.func @transform_1(%arg0: i32) -> (i32, i32) {
    %c0_i32 = arith.constant 0 : i32
    %c0_i32_0 = arith.constant 0 : i32
    %c0_i32_1 = arith.constant 0 : i32
    return %c0_i32, %c0_i32_0 : i32, i32
  }
  func.func @transform_2(%arg0: i32) -> (i32, i32) {
    %c0_i32 = arith.constant 0 : i32
    %c0_i32_0 = arith.constant 0 : i32
    %c0_i32_1 = arith.constant 0 : i32
    return %c0_i32, %c0_i32_0 : i32, i32
  }
  func.func @transform_3(%arg0: i32) -> (i32, i32) {
    %c0_i32 = arith.constant 0 : i32
    %c0_i32_0 = arith.constant 0 : i32
    %c0_i32_1 = arith.constant 0 : i32
    return %c0_i32, %c0_i32_0 : i32, i32
  }
  func.func @transform_4(%arg0: i32) -> (i32, i32, i32) {
    %c0_i32 = arith.constant 0 : i32
    %c0_i32_0 = arith.constant 0 : i32
    %c0_i32_1 = arith.constant 0 : i32
    return %arg0, %c0_i32, %c0_i32_0 : i32, i32, i32
  }
}

</mosaic_0001>

<llo_original>
// kernel: tpu_custom_call.1
$region0: #{tpu_custom_call.1}
  #allocation0 [shape = 'u32[]', space=smem, size = 0x4, offset = 0x4, fixed_abs, tag = 'smem constant byte address 0x4 - core index']
  #allocation1 [shape = 'u32[144,128]{1,0:T(1,128)}', space=vmem, size = 0x12000, scoped, tag = 'internal scratch']
  %s0 = inlined_call_operand.hbm [shape: f32[2,8,256], index: 0, kind: input, shape index: {}]
  %s1 = inlined_call_operand.hbm [shape: f32[8,72], index: 1, kind: input, shape index: {}]
  %s2 = inlined_call_operand.hbm [shape: f32[8,72], index: 2, kind: input, shape index: {}]
  %s3 = inlined_call_operand.hbm [shape: f32[9,256], index: 3, kind: input, shape index: {}]
  %s4 = inlined_call_operand.hbm [shape: f32[2,8,256], index: 4, kind: output, shape index: {}]
  %s5 = sld [smem:[#allocation0]]
  $region65: #{tpu_custom_call.1} parent=0
    _
  %s7 = ssub.s32 1, %s5
  %s8 = scalar_select 0, %s7, %s5
  $region1: #{tpu_custom_call.1} parent=0
    #allocation2 [shape = 'u8[16384]{0}', space=vmem, size = 0x4000, scoped, tag = 'input window, operand 0']
    #allocation3 [shape = 's32[2]{0}', space=sflag, size = 0x8, scoped, tag = 'scoped memory for tpu_custom_call.1']
    #allocation4 [shape = 's32[2]{0}', space=sflag, size = 0x8, scoped, tag = 'scoped memory for tpu_custom_call.1']
    #allocation5 [shape = 'u8[4096]{0}', space=vmem, size = 0x1000, scoped, tag = 'input window, operand 1, single buffered']
    #allocation6 [shape = 's32[1]{0}', space=sflag, size = 0x4, scoped, tag = 'scoped memory for tpu_custom_call.1']
    #allocation7 [shape = 'u8[4096]{0}', space=vmem, size = 0x1000, scoped, tag = 'input window, operand 2, single buffered']
    #allocation8 [shape = 'u8[16384]{0}', space=vmem, size = 0x4000, scoped, tag = 'input window, operand 3, single buffered']
    #allocation9 [shape = 's32[1]{0}', space=sflag, size = 0x4, scoped, tag = 'scoped memory for tpu_custom_call.1']
    #allocation10 [shape = 'u8[16384]{0}', space=vmem, size = 0x4000, scoped, tag = 'output window, operand 0']
    %9 = vsyncpa [#allocation3], 0
    %s10 = scalar_lea.sflag [#allocation3], 1
    %11 = vsyncpa %s10, 0
    %12 = vsyncpa [#allocation6], 0
    %13 = vsyncpa [#allocation9], 0
    %14 = vsyncpa [#allocation4], 0
    %s15 = scalar_lea.sflag [#allocation4], 1
    %16 = vsyncpa %s15, 0
    loop: start=0, step=1, limit=4
    $region2: #{tpu_custom_call.1} parent=1 // loop_pre_header
      _
    $region3: #{tpu_custom_call.1} parent=1 // loop_header
      %s18 = sphi 0, %s22
      %p19 = scmp.ge.s32.totalorder %s18, 4
      %s28 = sphi 0, %s30
      %s31 = sphi 0, %s28
      %s32 = sphi 0, %s31
      %s48 = sphi 0, %s32
      %s52 = sphi 0, %s52
      %s54 = sphi 0, %s52
      %s55 = sphi 0, %s54
      %s69 = sphi 0, %s55
      %s73 = sphi 0, %s73
      %s75 = sphi 0, %s73
      %s76 = sphi 0, %s75
      %s90 = sphi 0, %s76
      %s94 = sphi 0, %s94
      %s96 = sphi 0, %s94
      %s97 = sphi 0, %s96
      %s111 = sphi 0, %s97
      %s117 = sphi 0, %s119
      %s120 = sphi 0, %s117
      %s121 = sphi 0, %s120
      %s137 = sphi 0, %s121
    $region4: #{tpu_custom_call.1} parent=1 // loop_header_branch
      %21 = sbr.rel (%p19) target = $region8
    $region5: #{tpu_custom_call.1} parent=1 // loop_body
      %s23 = ssub.s32 %s18, 1
      %s24 = ssub.s32 %s18, 2
      %s25 = sadd.s32 %s18, 1
      %s26 = ssub.s32 %s18, %s25
      %p27 = scmp.eq.s32.totalorder %s26, 0
      %s29 = sadd.s32 %s28, 1
      %s30 = scalar_select %p27, %s28, %s29
      %p33 = pneg %p27
      %p34 = scmp.eq.s32.totalorder %s18, 1
      %p35 = por %p33, %p34
      %p36 = scmp.ne.s32.totalorder %s28, %s31
      %p37 = scmp.eq.s32.totalorder %s18, 0
      %p38 = por %p36, %p37
      %p39 = scmp.ne.s32.totalorder %s28, %s31
      %p40 = scmp.eq.s32.totalorder %s23, 1
      %p41 = por %p39, %p40
      %p42 = scmp.ne.s32.totalorder %s31, %s32
      %p43 = scmp.eq.s32.totalorder %s23, 0
      %p44 = por %p42, %p43
      %p45 = scmp.ne.s32.totalorder %s31, %s32
      %p46 = scmp.eq.s32.totalorder %s24, 1
      %p47 = por %p45, %p46
      %p49 = scmp.ne.s32.totalorder %s32, %s48
      %p50 = scmp.eq.s32.totalorder %s24, 0
      %p51 = por %p49, %p50
      %s53 = sadd.s32 %s52, 1
      %p56 = scmp.eq.s32.totalorder %s18, 1
      %p57 = scmp.ne.s32.totalorder %s52, %s54
      %p58 = scmp.eq.s32.totalorder %s18, 0
      %p59 = por %p57, %p58
      %p60 = scmp.ne.s32.totalorder %s52, %s54
      %p61 = scmp.eq.s32.totalorder %s23, 1
      %p62 = por %p60, %p61
      %p63 = scmp.ne.s32.totalorder %s54, %s55
      %p64 = scmp.eq.s32.totalorder %s23, 0
      %p65 = por %p63, %p64
      %p66 = scmp.ne.s32.totalorder %s54, %s55
      %p67 = scmp.eq.s32.totalorder %s24, 1
      %p68 = por %p66, %p67
      %p70 = scmp.ne.s32.totalorder %s55, %s69
      %p71 = scmp.eq.s32.totalorder %s24, 0
      %p72 = por %p70, %p71
      %s74 = sadd.s32 %s73, 1
      %p77 = scmp.eq.s32.totalorder %s18, 1
      %p78 = scmp.ne.s32.totalorder %s73, %s75
      %p79 = scmp.eq.s32.totalorder %s18, 0
      %p80 = por %p78, %p79
      %p81 = scmp.ne.s32.totalorder %s73, %s75
      %p82 = scmp.eq.s32.totalorder %s23, 1
      %p83 = por %p81, %p82
      %p84 = scmp.ne.s32.totalorder %s75, %s76
      %p85 = scmp.eq.s32.totalorder %s23, 0
      %p86 = por %p84, %p85
      %p87 = scmp.ne.s32.totalorder %s75, %s76
      %p88 = scmp.eq.s32.totalorder %s24, 1
      %p89 = por %p87, %p88
      %p91 = scmp.ne.s32.totalorder %s76, %s90
      %p92 = scmp.eq.s32.totalorder %s24, 0
      %p93 = por %p91, %p92
      %s95 = sadd.s32 %s94, 1
      %p98 = scmp.eq.s32.totalorder %s18, 1
      %p99 = scmp.ne.s32.totalorder %s94, %s96
      %p100 = scmp.eq.s32.totalorder %s18, 0
      %p101 = por %p99, %p100
      %p102 = scmp.ne.s32.totalorder %s94, %s96
      %p103 = scmp.eq.s32.totalorder %s23, 1
      %p104 = por %p102, %p103
      %p105 = scmp.ne.s32.totalorder %s96, %s97
      %p106 = scmp.eq.s32.totalorder %s23, 0
      %p107 = por %p105, %p106
      %p108 = scmp.ne.s32.totalorder %s96, %s97
      %p109 = scmp.eq.s32.totalorder %s24, 1
      %p110 = por %p108, %p109
      %p112 = scmp.ne.s32.totalorder %s97, %s111
      %p113 = scmp.eq.s32.totalorder %s24, 0
      %p114 = por %p112, %p113
      %s115 = ssub.s32 %s18, %s25
      %p116 = scmp.eq.s32.totalorder %s115, 0
      %s118 = sadd.s32 %s117, 1
      %s119 = scalar_select %p116, %s117, %s118
      %p122 = pneg %p116
      %p123 = scmp.eq.s32.totalorder %s18, 1
      %p124 = por %p122, %p123
      %p125 = scmp.ne.s32.totalorder %s117, %s120
      %p126 = scmp.eq.s32.totalorder %s18, 0
      %p127 = por %p125, %p126
      %p128 = scmp.ne.s32.totalorder %s117, %s120
      %p129 = scmp.eq.s32.totalorder %s23, 1
      %p130 = por %p128, %p129
      %p131 = scmp.ne.s32.totalorder %s120, %s121
      %p132 = scmp.eq.s32.totalorder %s23, 0
      %p133 = por %p131, %p132
      %p134 = scmp.ne.s32.totalorder %s120, %s121
      %p135 = scmp.eq.s32.totalorder %s24, 1
      %p136 = por %p134, %p135
      %p138 = scmp.ne.s32.totalorder %s121, %s137
      %p139 = scmp.eq.s32.totalorder %s24, 0
      %p140 = por %p138, %p139
      %p141 = scmp.le.s32.totalorder 1, %s18
      %p142 = scmp.lt.s32.totalorder %s18, 3
      %p143 = pnand %p141, %p142
      %p144 = pneg %p143
      // Predicated region
      $region9: #{tpu_custom_call.1} parent=5 // pred_check
        _
      $region10: #{tpu_custom_call.1} parent=5 // pred_check_branch
        %146 = sbr.rel (%p143) target = $region12
      $region11: #{tpu_custom_call.1} parent=5 // pred_region
        %s147 = ssub.s32 %s18, 1
        // Predicated region
        $region13: #{tpu_custom_call.1} parent=11 // pred_check
          %p148 = pneg %p65
        $region14: #{tpu_custom_call.1} parent=11 // pred_check_branch
          %150 = sbr.rel (%p148) target = $region16
        $region15: #{tpu_custom_call.1} parent=11 // pred_region
          %s152 = ssub.s32 128, 128
          %153 = vsyncadd [#allocation6], %s152
          %s155 = sshll.u32 [#allocation5], 4
          %s156 = int_to_ptr.vmem [resolvable:$true] %s155
          %158 = dma.hbm_to_vmem [thread:$0]  %s1, 128, %s156, [#allocation6]
        $region16: #{tpu_custom_call.1} parent=11 // pred_fallthru
          _
        // Predicated region
        $region17: #{tpu_custom_call.1} parent=11 // pred_check
          %p159 = pneg %p86
        $region18: #{tpu_custom_call.1} parent=11 // pred_check_branch
          %161 = sbr.rel (%p159) target = $region20
        $region19: #{tpu_custom_call.1} parent=11 // pred_region
          %s163 = ssub.s32 128, 128
          %164 = vsyncadd [#allocation6], %s163
          %s166 = sshll.u32 [#allocation7], 4
          %s167 = int_to_ptr.vmem [resolvable:$true] %s166
          %169 = dma.hbm_to_vmem [thread:$0]  %s2, 128, %s167, [#allocation6]
        $region20: #{tpu_custom_call.1} parent=11 // pred_fallthru
          _
        // Predicated region
        $region21: #{tpu_custom_call.1} parent=11 // pred_check
          %p170 = pneg %p107
        $region22: #{tpu_custom_call.1} parent=11 // pred_check_branch
          %172 = sbr.rel (%p170) target = $region24
        $region23: #{tpu_custom_call.1} parent=11 // pred_region
          %s174 = ssub.s32 512, 512
          %175 = vsyncadd [#allocation9], %s174
          %s176 = sshll.u32 [#allocation8], 4
          %s177 = int_to_ptr.vmem [resolvable:$true] %s176
          %182 = dma.hbm_to_vmem [thread:$0]  %s3, 512, %s177, [#allocation9], 256, 256, 16
        $region24: #{tpu_custom_call.1} parent=11 // pred_fallthru
          _
      $region12: #{tpu_custom_call.1} parent=5 // pred_fallthru
        _
      %p183 = scmp.lt.s32.totalorder %s18, 2
      // Predicated region
      $region25: #{tpu_custom_call.1} parent=5 // pred_check
        %p184 = pneg %p183
      $region26: #{tpu_custom_call.1} parent=5 // pred_check_branch
        %186 = sbr.rel (%p184) target = $region28
      $region27: #{tpu_custom_call.1} parent=5 // pred_region
        // Predicated region
        $region29: #{tpu_custom_call.1} parent=27 // pred_check
          %p187 = pneg %p38
        $region30: #{tpu_custom_call.1} parent=27 // pred_check_branch
          %189 = sbr.rel (%p187) target = $region32
        $region31: #{tpu_custom_call.1} parent=27 // pred_region
          %s190 = sand.u32 %s28, 1
          %s191 = scalar_lea.sflag [#allocation3], %s190
          %s192 = sand.u32 %s28, 1
          %s193 = smul.addr %s192, 16
          %s194 = scalar_lea.vmem [#allocation2], %s193
          %s196 = ssub.s32 256, 256
          %197 = vsyncadd %s191, %s196
          %s198 = smul.addr %s18, 2
          %s199 = smul.addr %s198, 128
          %s200 = scalar_lea.hbm %s0, %s199
          %s202 = sshll.u32 %s194, 4
          %s203 = int_to_ptr.vmem [resolvable:$true] %s202
          %205 = dma.hbm_to_vmem [thread:$0]  %s200, 256, %s203, %s191
        $region32: #{tpu_custom_call.1} parent=27 // pred_fallthru
          _
      $region28: #{tpu_custom_call.1} parent=5 // pred_fallthru
        _
      %p206 = scmp.le.s32.totalorder 1, %s18
      %p207 = scmp.lt.s32.totalorder %s18, 3
      %p208 = pnand %p206, %p207
      %p209 = pneg %p208
      // Predicated region
      $region33: #{tpu_custom_call.1} parent=5 // pred_check
        _
      $region34: #{tpu_custom_call.1} parent=5 // pred_check_branch
        %211 = sbr.rel (%p208) target = $region36
      $region35: #{tpu_custom_call.1} parent=5 // pred_region
        %s212 = ssub.s32 %s18, 1
        %s213 = sand.u32 %s31, 1
        %s214 = scalar_lea.sflag [#allocation3], %s213
        %s215 = sand.u32 %s31, 1
        %s216 = smul.addr %s215, 16
        %s217 = scalar_lea.vmem [#allocation2], %s216
        // Predicated region
        $region37: #{tpu_custom_call.1} parent=35 // pred_check
          %p218 = pneg %p44
        $region38: #{tpu_custom_call.1} parent=35 // pred_check_branch
          %220 = sbr.rel (%p218) target = $region40
        $region39: #{tpu_custom_call.1} parent=35 // pred_region
          %221 = dma.done %s214, 256
        $region40: #{tpu_custom_call.1} parent=35 // pred_fallthru
          _
        // Predicated region
        $region41: #{tpu_custom_call.1} parent=35 // pred_check
          %p222 = pneg %p65
        $region42: #{tpu_custom_call.1} parent=35 // pred_check_branch
          %224 = sbr.rel (%p222) target = $region44
        $region43: #{tpu_custom_call.1} parent=35 // pred_region
          %225 = dma.done [#allocation6], 128
        $region44: #{tpu_custom_call.1} parent=35 // pred_fallthru
          _
        // Predicated region
        $region45: #{tpu_custom_call.1} parent=35 // pred_check
          %p226 = pneg %p86
        $region46: #{tpu_custom_call.1} parent=35 // pred_check_branch
          %228 = sbr.rel (%p226) target = $region48
        $region47: #{tpu_custom_call.1} parent=35 // pred_region
          %229 = dma.done [#allocation6], 128
        $region48: #{tpu_custom_call.1} parent=35 // pred_fallthru
          _
        // Predicated region
        $region49: #{tpu_custom_call.1} parent=35 // pred_check
          %p230 = pneg %p107
        $region50: #{tpu_custom_call.1} parent=35 // pred_check_branch
          %232 = sbr.rel (%p230) target = $region52
        $region51: #{tpu_custom_call.1} parent=35 // pred_region
          %233 = dma.done [#allocation9], 512
        $region52: #{tpu_custom_call.1} parent=35 // pred_fallthru
          _
        %s234 = sand.u32 %s31, 1
        %s235 = scalar_lea.sflag [#allocation3], %s234
        %s236 = sand.u32 %s31, 1
        %s237 = smul.addr %s236, 16
        %s238 = scalar_lea.vmem [#allocation2], %s237
        %p239 = pneg %p44
        %p240 = pneg %p41
        %p241 = pneg %p65
        %p242 = pneg %p62
        %p243 = pneg %p86
        %p244 = pneg %p83
        %p245 = pneg %p107
        %p246 = pneg %p104
        %p247 = pneg %p133
        %p248 = pneg %p130
        %s249 = sand.u32 %s120, 1
        %s250 = scalar_lea.sflag [#allocation4], %s249
        %s251 = sand.u32 %s120, 1
        %s252 = smul.addr %s251, 16
        %s253 = scalar_lea.vmem [#allocation10], %s252
        %v254 = vld [vmem:[#allocation5] sm:$0xff]
        %v255 = vld [vmem:[#allocation7] sm:$0xff]
        %v256 = vld [vmem:[#allocation8] sm:$0xff]
        %v257 = vld [vmem:[#allocation8 + $0x8] sm:$0xff]
        %v258 = vld [vmem:[#allocation8 + $0x10] sm:$0x1]
        %v259 = vld [vmem:[#allocation8 + $0x18] sm:$0x1]
        %v260 = vld [vmem:[%s217] sm:$0xff]
        %v261 = vld [vmem:[%s217 + $0x8] sm:$0xff]
        %262 = vrot.lane.b32.xlu0 %v260, 17
        %v263 = vpop.permute.xlu0 %262
        %264 = vrot.lane.b32.xlu0 %v261, 17
        %v265 = vpop.permute.xlu0 %264
        %v266 = vlaneseq
        %v267 = vand.u32 %v266, 127
        %vm268 = vcmp.lt.s32.totalorder %v267, 17
        %v269 = vsel %vm268, %v263, %v265
        %v270 = vsel %vm268, %v265, %v263
        %v271 = vlaneseq
        %v272 = vshrl.u32 %v271, 7
        %v273 = vsub.s32 0, %v272
        %v274 = vrot.slane %v256, %v273
        %v275 = vlaneseq
        %v276 = vshrl.u32 %v275, 7
        %v277 = vsub.s32 0, %v276
        %v278 = vrot.slane %v257, %v277
        %v279 = vmul.f32 %v270, %v274
        %v280 = vmul.f32 %v269, %v278
        %281 = vrot.lane.b32.xlu0 %v260, 16
        %v282 = vpop.permute.xlu0 %281
        %283 = vrot.lane.b32.xlu0 %v261, 16
        %v284 = vpop.permute.xlu0 %283
        %vm285 = vcmp.lt.s32.totalorder %v267, 16
        %v286 = vsel %vm285, %v282, %v284
        %v287 = vsel %vm285, %v284, %v282
        %v288 = vlaneseq
        %v289 = vshrl.u32 %v288, 7
        %v290 = vsub.s32 1, %v289
        %v291 = vrot.slane %v256, %v290
        %v292 = vlaneseq
        %v293 = vshrl.u32 %v292, 7
        %v294 = vsub.s32 1, %v293
        %v295 = vrot.slane %v257, %v294
        %v296 = vmul.f32 %v287, %v291
        %v297 = vmul.f32 %v286, %v295
        %298 = vrot.lane.b32.xlu0 %v260, 15
        %v299 = vpop.permute.xlu0 %298
        %300 = vrot.lane.b32.xlu0 %v261, 15
        %v301 = vpop.permute.xlu0 %300
        %vm302 = vcmp.lt.s32.totalorder %v267, 15
        %v303 = vsel %vm302, %v299, %v301
        %v304 = vsel %vm302, %v301, %v299
        %v305 = vlaneseq
        %v306 = vshrl.u32 %v305, 7
        %v307 = vsub.s32 2, %v306
        %v308 = vrot.slane %v256, %v307
        %v309 = vlaneseq
        %v310 = vshrl.u32 %v309, 7
        %v311 = vsub.s32 2, %v310
        %v312 = vrot.slane %v257, %v311
        %v313 = vmul.f32 %v304, %v308
        %v314 = vmul.f32 %v303, %v312
        %315 = vrot.lane.b32.xlu0 %v260, 1
        %v316 = vpop.permute.xlu0 %315
        %317 = vrot.lane.b32.xlu0 %v261, 1
        %v318 = vpop.permute.xlu0 %317
        %vm319 = vcmp.lt.s32.totalorder %v267, 1
        %v320 = vsel %vm319, %v316, %v318
        %v321 = vsel %vm319, %v318, %v316
        %v322 = vlaneseq
        %v323 = vshrl.u32 %v322, 7
        %v324 = vsub.s32 3, %v323
        %v325 = vrot.slane %v256, %v324
        %v326 = vlaneseq
        %v327 = vshrl.u32 %v326, 7
        %v328 = vsub.s32 3, %v327
        %v329 = vrot.slane %v257, %v328
        %v330 = vmul.f32 %v321, %v325
        %v331 = vmul.f32 %v320, %v329
        %332 = vrot.lane.b32.xlu0 %v260, 127
        %v333 = vpop.permute.xlu0 %332
        %334 = vrot.lane.b32.xlu0 %v261, 127
        %v335 = vpop.permute.xlu0 %334
        %vm336 = vcmp.lt.s32.totalorder %v267, 127
        %v337 = vsel %vm336, %v333, %v335
        %v338 = vsel %vm336, %v335, %v333
        %v339 = vlaneseq
        %v340 = vshrl.u32 %v339, 7
        %v341 = vsub.s32 5, %v340
        %v342 = vrot.slane %v256, %v341
        %v343 = vlaneseq
        %v344 = vshrl.u32 %v343, 7
        %v345 = vsub.s32 5, %v344
        %v346 = vrot.slane %v257, %v345
        %v347 = vmul.f32 %v337, %v342
        %v348 = vmul.f32 %v338, %v346
        %349 = vrot.lane.b32.xlu0 %v260, 113
        %v350 = vpop.permute.xlu0 %349
        %351 = vrot.lane.b32.xlu0 %v261, 113
        %v352 = vpop.permute.xlu0 %351
        %vm353 = vcmp.lt.s32.totalorder %v267, 113
        %v354 = vsel %vm353, %v350, %v352
        %v355 = vsel %vm353, %v352, %v350
        %v356 = vlaneseq
        %v357 = vshrl.u32 %v356, 7
        %v358 = vsub.s32 6, %v357
        %v359 = vrot.slane %v256, %v358
        %v360 = vlaneseq
        %v361 = vshrl.u32 %v360, 7
        %v362 = vsub.s32 6, %v361
        %v363 = vrot.slane %v257, %v362
        %v364 = vmul.f32 %v354, %v359
        %v365 = vmul.f32 %v355, %v363
        %366 = vrot.lane.b32.xlu0 %v260, 112
        %v367 = vpop.permute.xlu0 %366
        %368 = vrot.lane.b32.xlu0 %v261, 112
        %v369 = vpop.permute.xlu0 %368
        %vm370 = vcmp.lt.s32.totalorder %v267, 112
        %v371 = vsel %vm370, %v367, %v369
        %v372 = vsel %vm370, %v369, %v367
        %v373 = vlaneseq
        %v374 = vshrl.u32 %v373, 7
        %v375 = vsub.s32 7, %v374
        %v376 = vrot.slane %v256, %v375
        %v377 = vlaneseq
        %v378 = vshrl.u32 %v377, 7
        %v379 = vsub.s32 7, %v378
        %v380 = vrot.slane %v257, %v379
        %v381 = vmul.f32 %v371, %v376
        %v382 = vmul.f32 %v372, %v380
        %383 = vrot.lane.b32.xlu0 %v260, 111
        %v384 = vpop.permute.xlu0 %383
        %385 = vrot.lane.b32.xlu0 %v261, 111
        %v386 = vpop.permute.xlu0 %385
        %vm387 = vcmp.lt.s32.totalorder %v267, 111
        %v388 = vsel %vm387, %v384, %v386
        %v389 = vsel %vm387, %v386, %v384
        %v390 = vlaneseq
        %v391 = vshrl.u32 %v390, 7
        %v392 = vsub.s32 0, %v391
        %v393 = vrot.slane %v258, %v392
        %v394 = vlaneseq
        %v395 = vshrl.u32 %v394, 7
        %v396 = vsub.s32 0, %v395
        %v397 = vrot.slane %v259, %v396
        %v398 = vmul.f32 %v388, %v393
        %v399 = vmul.f32 %v389, %v397
        %vm400 = vcmask 588800
        %v402 = vsel %vm400, %v254, 0
        %404 = vmatprep.subr.mxu0 %v280
        %405 = vmatpush1.msra.mxu0 %v279
        %406 = vmatprep.subr.mxu0 %v297
        %407 = vmatpush1.msra.mxu0 %v296
        %408 = vmatprep.subr.mxu0 %v314
        %409 = vmatpush1.msra.mxu0 %v313
        %410 = vmatprep.subr.mxu0 %v331
        %411 = vmatpush1.msra.mxu0 %v330
        %412 = vmatprep.subr.mxu0 %v261
        %413 = vmatpush1.msra.mxu0 %v260
        %414 = vmatprep.subr.mxu0 %v348
        %415 = vmatpush1.msra.mxu0 %v347
        %416 = vmatprep.subr.mxu0 %v365
        %417 = vmatpush1.msra.mxu0 %v364
        %418 = vmatprep.subr.mxu0 %v382
        %419 = vmatpush1.msra.mxu0 %v381
        %420 = vmatprep.subr.mxu0 %v399
        %421 = vmatpush1.msra.mxu0 %v398
        %422 = vmatprep.subr.mxu0 0.0
        %423 = vmatpush1.msra.mxu0 0.0
        %424 = vmatprep.subr.mxu0 0.0
        %425 = vmatpush1.msra.mxu0 0.0
        %426 = vmatprep.subr.mxu0 0.0
        %427 = vmatpush1.msra.mxu0 0.0
        %428 = vmatprep.subr.mxu0 0.0
        %429 = vmatpush1.msra.mxu0 0.0
        %430 = vmatprep.subr.mxu0 0.0
        %431 = vmatpush1.msra.mxu0 0.0
        %432 = vmatprep.subr.mxu0 0.0
        %433 = vmatpush1.msra.mxu0 0.0
        %434 = vmatprep.subr.mxu0 0.0
        %435 = vmatpush1.msra.mxu0 0.0
        %436 = vmatprep.subr.mxu0 0.0
        %437 = vmatpush1.msra.mxu0 0.0
        %438 = vmatprep.subr.mxu0 0.0
        %439 = vmatpush1.msra.mxu0 0.0
        %440 = vmatprep.subr.mxu0 0.0
        %441 = vmatpush1.msra.mxu0 0.0
        %442 = vmatprep.subr.mxu0 0.0
        %443 = vmatpush1.msra.mxu0 0.0
        %444 = vmatprep.subr.mxu0 0.0
        %445 = vmatpush1.msra.mxu0 0.0
        %446 = vmatprep.subr.mxu0 0.0
        %447 = vmatpush1.msra.mxu0 0.0
        %448 = vmatprep.subr.mxu0 0.0
        %449 = vmatpush1.msra.mxu0 0.0
        %450 = vmatprep.subr.mxu0 0.0
        %451 = vmatpush1.msra.mxu0 0.0
        %452 = vmatprep.subr.mxu0 0.0
        %453 = vmatpush1.msra.mxu0 0.0
        %454 = vmatprep.subr.mxu0 0.0
        %455 = vmatpush1.msra.mxu0 0.0
        %456 = vmatprep.subr.mxu0 0.0
        %457 = vmatpush1.msra.mxu0 0.0
        %458 = vmatprep.subr.mxu0 0.0
        %459 = vmatpush1.msra.mxu0 0.0
        %460 = vmatprep.subr.mxu0 0.0
        %461 = vmatpush1.msra.mxu0 0.0
        %462 = vmatprep.subr.mxu0 0.0
        %463 = vmatpush1.msra.mxu0 0.0
        %464 = vmatprep.subr.mxu0 0.0
        %465 = vmatpush1.msra.mxu0 0.0
        %466 = vmatprep.subr.mxu0 0.0
        %467 = vmatpush1.msra.mxu0 0.0
        %468 = vmatprep.mubr.f32.mxu0 0.0
        %469 = vmatmul.mubr.f32.gmra.mrb[0].mxu0 %v402
        %v470 = vpop.f32.mrb[0].mxu0
        %v471 = vadd.f32 0.0, %v470
        %v472 = vpop.f32.mrb[0].mxu0
        %v473 = vadd.f32 0.0, %v472
        %474 = vdwg.mxu0
        %v475 = vadd.f32 %v471, %v473
        %476 = vadd.xlane.f32.xlu0 %v475
        %v477 = vpop.xlane.xlu0 %476
        %v478 = vmul.f32 %v477, 0.00390625
        %v479 = vsub.f32 %v471, %v478
        %v480 = vsub.f32 %v473, %v478
        %v481 = vmul.f32 %v479, %v479
        %v482 = vmul.f32 %v480, %v480
        %v483 = vadd.f32 %v481, %v482
        %484 = vadd.xlane.f32.xlu0 %v483
        %v485 = vpop.xlane.xlu0 %484
        %v486 = vmul.f32 %v485, 0.00390625
        %v487 = vadd.f32 %v486, 1e-05
        %v488 = vrsqrt.pop %v487
        %v489 = vmul.f32 %v479, %v488
        %v490 = vmul.f32 %v480, %v488
        %vm491 = vcmp.ge.f32.partialorder %v489, 0.0
        %vm492 = vcmp.ge.f32.partialorder %v490, 0.0
        %v493 = vmul.f32 %v489, 0.01
        %v494 = vmul.f32 %v490, 0.01
        %v495 = vsel %vm491, %v489, %v493
        %v496 = vsel %vm492, %v490, %v494
        %497 = vrot.lane.b32.xlu0 %v495, 17
        %v498 = vpop.permute.xlu0 %497
        %499 = vrot.lane.b32.xlu0 %v496, 17
        %v500 = vpop.permute.xlu0 %499
        %v501 = vsel %vm268, %v498, %v500
        %v502 = vsel %vm268, %v500, %v498
        %v503 = vmul.f32 %v502, %v274
        %v504 = vmul.f32 %v501, %v278
        %505 = vrot.lane.b32.xlu0 %v495, 16
        %v506 = vpop.permute.xlu0 %505
        %507 = vrot.lane.b32.xlu0 %v496, 16
        %v508 = vpop.permute.xlu0 %507
        %v509 = vsel %vm285, %v506, %v508
        %v510 = vsel %vm285, %v508, %v506
        %v511 = vmul.f32 %v510, %v291
        %v512 = vmul.f32 %v509, %v295
        %513 = vrot.lane.b32.xlu0 %v495, 15
        %v514 = vpop.permute.xlu0 %513
        %515 = vrot.lane.b32.xlu0 %v496, 15
        %v516 = vpop.permute.xlu0 %515
        %v517 = vsel %vm302, %v514, %v516
        %v518 = vsel %vm302, %v516, %v514
        %v519 = vmul.f32 %v518, %v308
        %v520 = vmul.f32 %v517, %v312
        %521 = vrot.lane.b32.xlu0 %v495, 1
        %v522 = vpop.permute.xlu0 %521
        %523 = vrot.lane.b32.xlu0 %v496, 1
        %v524 = vpop.permute.xlu0 %523
        %v525 = vsel %vm319, %v522, %v524
        %v526 = vsel %vm319, %v524, %v522
        %v527 = vmul.f32 %v526, %v325
        %v528 = vmul.f32 %v525, %v329
        %529 = vrot.lane.b32.xlu0 %v495, 127
        %v530 = vpop.permute.xlu0 %529
        %531 = vrot.lane.b32.xlu0 %v496, 127
        %v532 = vpop.permute.xlu0 %531
        %v533 = vsel %vm336, %v530, %v532
        %v534 = vsel %vm336, %v532, %v530
        %v535 = vmul.f32 %v533, %v342
        %v536 = vmul.f32 %v534, %v346
        %537 = vrot.lane.b32.xlu0 %v495, 113
        %v538 = vpop.permute.xlu0 %537
        %539 = vrot.lane.b32.xlu0 %v496, 113
        %v540 = vpop.permute.xlu0 %539
        %v541 = vsel %vm353, %v538, %v540
        %v542 = vsel %vm353, %v540, %v538
        %v543 = vmul.f32 %v541, %v359
        %v544 = vmul.f32 %v542, %v363
        %545 = vrot.lane.b32.xlu0 %v495, 112
        %v546 = vpop.permute.xlu0 %545
        %547 = vrot.lane.b32.xlu0 %v496, 112
        %v548 = vpop.permute.xlu0 %547
        %v549 = vsel %vm370, %v546, %v548
        %v550 = vsel %vm370, %v548, %v546
        %v551 = vmul.f32 %v549, %v376
        %v552 = vmul.f32 %v550, %v380
        %553 = vrot.lane.b32.xlu0 %v495, 111
        %v554 = vpop.permute.xlu0 %553
        %555 = vrot.lane.b32.xlu0 %v496, 111
        %v556 = vpop.permute.xlu0 %555
        %v557 = vsel %vm387, %v554, %v556
        %v558 = vsel %vm387, %v556, %v554
        %v559 = vmul.f32 %v557, %v393
        %v560 = vmul.f32 %v558, %v397
        %v562 = vsel %vm400, %v255, 0
        %564 = vmatprep.subr.mxu0 %v504
        %565 = vmatpush1.msra.mxu0 %v503
        %566 = vmatprep.subr.mxu0 %v512
        %567 = vmatpush1.msra.mxu0 %v511
        %568 = vmatprep.subr.mxu0 %v520
        %569 = vmatpush1.msra.mxu0 %v519
        %570 = vmatprep.subr.mxu0 %v528
        %571 = vmatpush1.msra.mxu0 %v527
        %572 = vmatprep.subr.mxu0 %v496
        %573 = vmatpush1.msra.mxu0 %v495
        %574 = vmatprep.subr.mxu0 %v536
        %575 = vmatpush1.msra.mxu0 %v535
        %576 = vmatprep.subr.mxu0 %v544
        %577 = vmatpush1.msra.mxu0 %v543
        %578 = vmatprep.subr.mxu0 %v552
        %579 = vmatpush1.msra.mxu0 %v551
        %580 = vmatprep.subr.mxu0 %v560
        %581 = vmatpush1.msra.mxu0 %v559
        %582 = vmatprep.subr.mxu0 0.0
        %583 = vmatpush1.msra.mxu0 0.0
        %584 = vmatprep.subr.mxu0 0.0
        %585 = vmatpush1.msra.mxu0 0.0
        %586 = vmatprep.subr.mxu0 0.0
        %587 = vmatpush1.msra.mxu0 0.0
        %588 = vmatprep.subr.mxu0 0.0
        %589 = vmatpush1.msra.mxu0 0.0
        %590 = vmatprep.subr.mxu0 0.0
        %591 = vmatpush1.msra.mxu0 0.0
        %592 = vmatprep.subr.mxu0 0.0
        %593 = vmatpush1.msra.mxu0 0.0
        %594 = vmatprep.subr.mxu0 0.0
        %595 = vmatpush1.msra.mxu0 0.0
        %596 = vmatprep.subr.mxu0 0.0
        %597 = vmatpush1.msra.mxu0 0.0
        %598 = vmatprep.subr.mxu0 0.0
        %599 = vmatpush1.msra.mxu0 0.0
        %600 = vmatprep.subr.mxu0 0.0
        %601 = vmatpush1.msra.mxu0 0.0
        %602 = vmatprep.subr.mxu0 0.0
        %603 = vmatpush1.msra.mxu0 0.0
        %604 = vmatprep.subr.mxu0 0.0
        %605 = vmatpush1.msra.mxu0 0.0
        %606 = vmatprep.subr.mxu0 0.0
        %607 = vmatpush1.msra.mxu0 0.0
        %608 = vmatprep.subr.mxu0 0.0
        %609 = vmatpush1.msra.mxu0 0.0
        %610 = vmatprep.subr.mxu0 0.0
        %611 = vmatpush1.msra.mxu0 0.0
        %612 = vmatprep.subr.mxu0 0.0
        %613 = vmatpush1.msra.mxu0 0.0
        %614 = vmatprep.subr.mxu0 0.0
        %615 = vmatpush1.msra.mxu0 0.0
        %616 = vmatprep.subr.mxu0 0.0
        %617 = vmatpush1.msra.mxu0 0.0
        %618 = vmatprep.subr.mxu0 0.0
        %619 = vmatpush1.msra.mxu0 0.0
        %620 = vmatprep.subr.mxu0 0.0
        %621 = vmatpush1.msra.mxu0 0.0
        %622 = vmatprep.subr.mxu0 0.0
        %623 = vmatpush1.msra.mxu0 0.0
        %624 = vmatprep.subr.mxu0 0.0
        %625 = vmatpush1.msra.mxu0 0.0
        %626 = vmatprep.subr.mxu0 0.0
        %627 = vmatpush1.msra.mxu0 0.0
        %628 = vmatprep.mubr.f32.mxu0 0.0
        %629 = vmatmul.mubr.f32.gmra.mrb[0].mxu0 %v562
        %v630 = vpop.f32.mrb[0].mxu0
        %v631 = vadd.f32 0.0, %v630
        %v632 = vpop.f32.mrb[0].mxu0
        %v633 = vadd.f32 0.0, %v632
        %634 = vdwg.mxu0
        %v635 = vadd.f32 %v631, %v633
        %636 = vadd.xlane.f32.xlu0 %v635
        %v637 = vpop.xlane.xlu0 %636
        %v638 = vmul.f32 %v637, 0.00390625
        %v639 = vsub.f32 %v631, %v638
        %v640 = vsub.f32 %v633, %v638
        %v641 = vmul.f32 %v639, %v639
        %v642 = vmul.f32 %v640, %v640
        %v643 = vadd.f32 %v641, %v642
        %644 = vadd.xlane.f32.xlu0 %v643
        %v645 = vpop.xlane.xlu0 %644
        %v646 = vmul.f32 %v645, 0.00390625
        %v647 = vadd.f32 %v646, 1e-05
        %v648 = vrsqrt.pop %v647
        %v649 = vmul.f32 %v639, %v648
        %v650 = vmul.f32 %v640, %v648
        %vm651 = vcmp.ge.f32.partialorder %v649, 0.0
        %vm652 = vcmp.ge.f32.partialorder %v650, 0.0
        %v653 = vmul.f32 %v649, 0.01
        %v654 = vmul.f32 %v650, 0.01
        %v655 = vsel %vm651, %v649, %v653
        %v656 = vsel %vm652, %v650, %v654
        %657 = vst [vmem:[%s253] sm:$0xff] %v655
        %658 = vst [vmem:[%s253 + $0x8] sm:$0xff] %v656
        %s659 = sand.u32 %s120, 1
        %s660 = scalar_lea.sflag [#allocation4], %s659
        %s661 = sand.u32 %s120, 1
        %s662 = smul.addr %s661, 16
        %s663 = scalar_lea.vmem [#allocation10], %s662
        // Predicated region
        $region53: #{tpu_custom_call.1} parent=35 // pred_check
          %p664 = pneg %p130
        $region54: #{tpu_custom_call.1} parent=35 // pred_check_branch
          %666 = sbr.rel (%p664) target = $region56
        $region55: #{tpu_custom_call.1} parent=35 // pred_region
          %s668 = ssub.s32 256, 256
          %669 = vsyncadd %s660, %s668
          %s670 = smul.addr %s23, 2
          %s671 = smul.addr %s670, 128
          %s672 = scalar_lea.hbm %s4, %s671
          %s674 = sshll.u32 %s663, 4
          %s675 = int_to_ptr.vmem [resolvable:$true] %s674
          %677 = dma.vmem_to_hbm [thread:$0]  %s675, 256, %s672, %s660
        $region56: #{tpu_custom_call.1} parent=35 // pred_fallthru
          _
      $region36: #{tpu_custom_call.1} parent=5 // pred_fallthru
        _
      %p678 = scmp.le.s32.totalorder 2, %s18
      // Predicated region
      $region57: #{tpu_custom_call.1} parent=5 // pred_check
        %p679 = pneg %p678
      $region58: #{tpu_custom_call.1} parent=5 // pred_check_branch
        %681 = sbr.rel (%p679) target = $region60
      $region59: #{tpu_custom_call.1} parent=5 // pred_region
        %s682 = ssub.s32 %s18, 2
        // Predicated region
        $region61: #{tpu_custom_call.1} parent=59 // pred_check
          %p683 = pneg %p136
        $region62: #{tpu_custom_call.1} parent=59 // pred_check_branch
          %685 = sbr.rel (%p683) target = $region64
        $region63: #{tpu_custom_call.1} parent=59 // pred_region
          %s686 = sand.u32 %s121, 1
          %s687 = scalar_lea.sflag [#allocation4], %s686
          %s688 = sand.u32 %s121, 1
          %s689 = smul.addr %s688, 16
          %s690 = scalar_lea.vmem [#allocation10], %s689
          %691 = dma.done %s687, 256
        $region64: #{tpu_custom_call.1} parent=59 // pred_fallthru
          _
      $region60: #{tpu_custom_call.1} parent=5 // pred_fallthru
        _
    $region6: #{tpu_custom_call.1} parent=1 // loop_footer
      %s22 = sadd.s32 1, %s18
    $region7: #{tpu_custom_call.1} parent=1 // loop_footer_branch
      %17 = sbr.rel target = $region3
    $region8: #{tpu_custom_call.1} parent=1 // loop_exit
      _
    %692 = vsyncpa [#allocation3], 1
    %s693 = scalar_lea.sflag [#allocation3], 1
    %694 = vsyncpa %s693, 1
    %695 = vsyncpa [#allocation6], 1
    %696 = vsyncpa [#allocation9], 1
    %697 = vsyncpa [#allocation4], 1
    %s698 = scalar_lea.sflag [#allocation4], 1
    %699 = vsyncpa %s698, 1

</llo_original>
